<compile_context>
chip_gen: v7x
topology: tpu7x:2x2x1
jax: 0.10.0
libtpu: 0.0.40
codegen_flags: <defaults>
</compile_context>

<pallas_src>
import functools

import jax
import jax.numpy as jnp
import numpy as np
from jax.experimental import pallas as pl
from jax.experimental.pallas import tpu as pltpu


# ----------------------------------------------------------------------------
# Stage 1: gumbel-softmax + server assignment + per-server client weights.
# Tiny (B, N) problem, computed once (grid-less pallas_call, whole arrays in VMEM).
# ----------------------------------------------------------------------------
def _gs_assign_kernel(prob_ref, gumbel_ref, gs_ref, assign_ref, wnorm_t_ref,
                      *, temper, scalar, num_servers):
    prob = prob_ref[...]                                   # (B, N)
    g = gumbel_ref[...]                                    # (B, N)

    # softmax(probability, dim=1) * scalar   (exact division: overhead-bound stage)
    p = jnp.exp(prob - jnp.max(prob, axis=1, keepdims=True))
    p = p / jnp.sum(p, axis=1, keepdims=True)
    logits = p * scalar

    # gumbel_softmax(logits, tau=temper, hard=False):
    #   softmax((logits + gumbel_noise) / tau, dim=1)
    z = (logits + g) * (1.0 / temper)
    zmax = jnp.max(z, axis=1, keepdims=True)
    ez = jnp.exp(z - zmax)
    y = ez / jnp.sum(ez, axis=1, keepdims=True)

    # first-occurrence argmax over dim 1 -> one-hot server assignment.
    # argmax(y) == argmax(z) up to rounding (softmax is monotone); gumbel noise
    # makes exact ties vanishingly unlikely in practice.
    col = jax.lax.broadcasted_iota(jnp.int32, z.shape, 1)
    is_max = (z == zmax)
    amax = jnp.min(jnp.where(is_max, col, num_servers), axis=1, keepdims=True)
    onehot = (col == amax).astype(y.dtype)                 # (B, N)

    # per-server column-normalized client weights (0 for empty servers)
    wm = y * onehot                                        # (B, N)
    csum = jnp.sum(wm, axis=0, keepdims=True)              # (1, N)
    safe = jnp.where(csum > 0, csum, 1.0)
    wnorm = jnp.where(csum > 0, wm / safe, 0.0)            # (B, N)

    gs_ref[...] = y
    assign_ref[...] = onehot
    # Emit pre-transposed so Stage 2's contraction is a plain (N,B)@(B,TP) dot
    # (no per-grid-step XLU transpose of the lhs tile).
    wnorm_t_ref[...] = wnorm.T                             # (N, B)


# ----------------------------------------------------------------------------
# Stage 2: aggregation of flattened client models, tiled over P.
# Body is a single MXU op producing a lane-dense (N, tile_p) output tile.
# ----------------------------------------------------------------------------
def _agg_kernel(wnorm_t_ref, params_ref, agg_ref):
    # (N, TP) = (N, B) @ (B, TP)
    agg_ref[...] = jnp.dot(wnorm_t_ref[...], params_ref[...],
                           preferred_element_type=jnp.float32)


def _vmem_capacity_bytes():
    try:
        return int(pltpu.get_tpu_info().vmem_capacity_bytes)
    except Exception:
        return 64 * 1024 * 1024        # conservative default (v7x-sized)


def personal_federated_forward(probability, gumbel_noise, client_params,
                               temper, scalar):
    B, N = probability.shape
    Bp, P = client_params.shape
    assert Bp == B

    # ---- Stage 1: single-shot (B, N) kernel -------------------------------
    setup = functools.partial(_gs_assign_kernel,
                              temper=float(temper),
                              scalar=float(scalar),
                              num_servers=N)
    gs, assign, wnorm_t = pl.pallas_call(
        setup,
        out_shape=(
            jax.ShapeDtypeStruct((B, N), jnp.float32),  # result_gs
            jax.ShapeDtypeStruct((B, N), jnp.float32),  # one-hot assignment
            jax.ShapeDtypeStruct((N, B), jnp.float32),  # column-normalized weights^T
        ),
    )(probability, gumbel_noise)

    # ---- Stage 2: tiled aggregation over P ---------------------------------
    # Bandwidth-bound: size tile_p from a per-generation VMEM byte budget
    # (double-buffered (B+N)-column tiles) so the ~0.35 us per-step overhead is
    # amortized.  ~65% of VMEM: ~42 MiB on v7x (64 MiB), ~83 MiB on v5e/v6e.
    vmem_cap = _vmem_capacity_bytes()
    budget = int(0.65 * vmem_cap)
    bytes_per_col = 2 * (B + N) * 4          # double-buffered input + output column
    tile_p = max(128, (budget // bytes_per_col) // 128 * 128)
    lane_pad = 128 * pl.cdiv(P, 128)         # whole (padded) P if it fits the budget
    tile_p = min(tile_p, lane_pad)
    num_tiles = pl.cdiv(P, tile_p)           # Pallas masks the partial last block

    # Explicit scoped-VMEM limit (defaults are 16/32 MiB, well below the budget).
    step_bytes = 2 * (B + N) * tile_p * 4 + 2 * B * N * 4
    vmem_limit = int(min(vmem_cap - 2 * 1024 * 1024,
                         max(step_bytes + 2 * 1024 * 1024, 8 * 1024 * 1024)))

    # Advisory cost: memory-bound custom call (helps XLA overlap surrounding ops).
    cost = pl.CostEstimate(flops=2 * B * N * P,
                           transcendentals=0,
                           bytes_accessed=4 * ((B + N) * P + B * N))

    # TODO(synk): if B ever grows to hundreds/thousands of clients, add B as an
    # extra "arbitrary" grid axis with a float32 VMEM accumulator; if that forces
    # tile_p back down, bump the params BlockSpec to pipeline_mode=pl.Buffered(3).
    # TODO(synk): streaming client_params as bfloat16 would ~1.5-2x this stage
    # (bandwidth-bound) but is a numerics-policy change, so it is not done here.
    agg = pl.pallas_call(
        _agg_kernel,
        out_shape=jax.ShapeDtypeStruct((N, P), jnp.float32),
        grid=(num_tiles,),
        in_specs=[
            pl.BlockSpec((N, B), lambda j: (0, 0)),
            pl.BlockSpec((B, tile_p), lambda j: (0, j)),
        ],
        out_specs=pl.BlockSpec((N, tile_p), lambda j: (0, j)),
        compiler_params=pltpu.CompilerParams(
            dimension_semantics=("parallel",),   # megacore-safe: no resident outputs
            vmem_limit_bytes=vmem_limit),
        cost_estimate=cost,
    )(wnorm_t, client_params)

    return gs, assign, agg


def _reference(probability, gumbel_noise, client_params, temper, scalar):
    p = jax.nn.softmax(probability, axis=1) * scalar
    y = jax.nn.softmax((p + gumbel_noise) / temper, axis=1)
    amax = jnp.argmax(y, axis=1)
    onehot = jax.nn.one_hot(amax, probability.shape[1], dtype=y.dtype)
    wm = y * onehot
    csum = jnp.sum(wm, axis=0, keepdims=True)
    wnorm = jnp.where(csum > 0, wm / jnp.where(csum > 0, csum, 1.0), 0.0)
    agg = wnorm.T @ client_params
    return y, onehot, agg


if __name__ == "__main__":
    key = jax.random.PRNGKey(0)
    k_gumbel, k_params, k_prob = jax.random.split(key, 3)

    batchSize = 8          # number of clients on this server
    numOfCliOnSer = 4      # number of sub-servers / groups
    P = 320                # flattened per-client model parameter size (not /128)
    temper = 1.0
    scalar = 10.0
    initalMode = "Avg"     # 'Avg' -> 20 * ones; 'Random' -> uniform

    if initalMode == "Avg":
        probability = 20.0 * jnp.ones((batchSize, numOfCliOnSer), jnp.float32)
    else:
        probability = jax.random.uniform(k_prob, (batchSize, numOfCliOnSer),
                                         dtype=jnp.float32)

    gumbel_noise = jax.random.gumbel(k_gumbel, (batchSize, numOfCliOnSer),
                                     dtype=jnp.float32)
    # stateLis: each client's model state dict, flattened to a P-vector
    client_params = jax.random.normal(k_params, (batchSize, P), dtype=jnp.float32)

    result_gs, assign, agg = personal_federated_forward(
        probability, gumbel_noise, client_params, temper, scalar)
    jax.block_until_ready((result_gs, assign, agg))

    # correctness check against a pure-JAX reference (exact divisions in-kernel)
    ref_gs, ref_assign, ref_agg = _reference(
        probability, gumbel_noise, client_params, temper, scalar)
    np.testing.assert_allclose(np.asarray(result_gs), np.asarray(ref_gs),
                               rtol=1e-5, atol=1e-6)
    np.testing.assert_allclose(np.asarray(assign), np.asarray(ref_assign),
                               rtol=0, atol=0)
    np.testing.assert_allclose(np.asarray(agg), np.asarray(ref_agg),
                               rtol=1e-5, atol=1e-5)

    # host-side glue: rebuild the dict-structured outputs of the torch module
    # TODO(synk): torch returns Python dicts keyed by server id; this bookkeeping
    # is host-side and stays outside the kernel.
    maxpos = np.asarray(assign).argmax(axis=1)
    CliOnSerDic = {i: [int(c) for c in np.where(maxpos == i)[0]]
                   for i in range(numOfCliOnSer)}
    weightsOfCliOnSer = {i: np.asarray(agg)[i]
                         for i in range(numOfCliOnSer) if len(CliOnSerDic[i]) > 0}
    _ = (result_gs, weightsOfCliOnSer, CliOnSerDic)  # == torch forward's return tuple

    print("KERNEL_OK")
</pallas_src>

<mosaic_0001>
module attributes {stable_mosaic.version = 11 : i64} {
  func.func @_gs_assign_kernel(%arg0: memref<8x4xf32, #tpu.memory_space<vmem>>, %arg1: memref<8x4xf32, #tpu.memory_space<vmem>>, %arg2: memref<8x4xf32, #tpu.memory_space<vmem>>, %arg3: memref<8x4xf32, #tpu.memory_space<vmem>>, %arg4: memref<4x8xf32, #tpu.memory_space<vmem>>) attributes {dimension_semantics = [], scalar_prefetch = 0 : i64, scratch_operands = 0 : i64, tpu.core_type = #tpu.core_type<tc>} {
    %c0 = arith.constant 0 : index
    %c0_0 = arith.constant 0 : index
    %0 = vector.load %arg0[%c0, %c0_0] : memref<8x4xf32, #tpu.memory_space<vmem>>, vector<8x4xf32>
    %c0_1 = arith.constant 0 : index
    %c0_2 = arith.constant 0 : index
    %1 = vector.load %arg1[%c0_1, %c0_2] : memref<8x4xf32, #tpu.memory_space<vmem>>, vector<8x4xf32>
    %cst = arith.constant dense<0xFF800000> : vector<8xf32>
    %2 = vector.multi_reduction <maximumf>, %0, %cst [1] : vector<8x4xf32> to vector<8xf32>
    %3 = vector.shape_cast %2 : vector<8xf32> to vector<8x1xf32>
    %4 = vector.broadcast %3 : vector<8x1xf32> to vector<8x4xf32>
    %5 = arith.subf %0, %4 : vector<8x4xf32>
    %6 = math.exp %5 : vector<8x4xf32>
    %cst_3 = arith.constant dense<0.000000e+00> : vector<8xf32>
    %7 = vector.multi_reduction <add>, %6, %cst_3 [1] : vector<8x4xf32> to vector<8xf32>
    %8 = vector.shape_cast %7 : vector<8xf32> to vector<8x1xf32>
    %9 = vector.broadcast %8 : vector<8x1xf32> to vector<8x4xf32>
    %10 = arith.divf %6, %9 : vector<8x4xf32>
    %cst_4 = arith.constant 1.000000e+01 : f32
    %11 = vector.broadcast %cst_4 : f32 to vector<8x4xf32>
    %12 = arith.mulf %10, %11 : vector<8x4xf32>
    %13 = arith.addf %12, %1 : vector<8x4xf32>
    %cst_5 = arith.constant 1.000000e+00 : f32
    %14 = vector.broadcast %cst_5 : f32 to vector<8x4xf32>
    %15 = arith.mulf %13, %14 : vector<8x4xf32>
    %cst_6 = arith.constant dense<0xFF800000> : vector<8xf32>
    %16 = vector.multi_reduction <maximumf>, %15, %cst_6 [1] : vector<8x4xf32> to vector<8xf32>
    %17 = vector.shape_cast %16 : vector<8xf32> to vector<8x1xf32>
    %18 = vector.broadcast %17 : vector<8x1xf32> to vector<8x4xf32>
    %19 = arith.subf %15, %18 : vector<8x4xf32>
    %20 = math.exp %19 : vector<8x4xf32>
    %cst_7 = arith.constant dense<0.000000e+00> : vector<8xf32>
    %21 = vector.multi_reduction <add>, %20, %cst_7 [1] : vector<8x4xf32> to vector<8xf32>
    %22 = vector.shape_cast %21 : vector<8xf32> to vector<8x1xf32>
    %23 = vector.broadcast %22 : vector<8x1xf32> to vector<8x4xf32>
    %24 = arith.divf %20, %23 : vector<8x4xf32>
    %25 = tpu.iota {dimensions = array<i32: 1>} : vector<8x4xi32>
    %26 = vector.broadcast %17 : vector<8x1xf32> to vector<8x4xf32>
    %27 = arith.cmpf oeq, %15, %26 : vector<8x4xf32>
    %c4_i32 = arith.constant 4 : i32
    %28 = vector.broadcast %c4_i32 : i32 to vector<8x4xi32>
    %29 = arith.select %27, %25, %28 : vector<8x4xi1>, vector<8x4xi32>
    %cst_8 = arith.constant dense<2147483647> : vector<8xi32>
    %30 = vector.multi_reduction <minsi>, %29, %cst_8 [1] : vector<8x4xi32> to vector<8xi32>
    %31 = vector.shape_cast %30 : vector<8xi32> to vector<8x1xi32>
    %32 = vector.broadcast %31 : vector<8x1xi32> to vector<8x4xi32>
    %33 = arith.cmpi eq, %25, %32 : vector<8x4xi32>
    %34 = arith.extui %33 : vector<8x4xi1> to vector<8x4xi32>
    %35 = arith.sitofp %34 : vector<8x4xi32> to vector<8x4xf32>
    %36 = arith.mulf %24, %35 : vector<8x4xf32>
    %cst_9 = arith.constant dense<0.000000e+00> : vector<4xf32>
    %37 = vector.multi_reduction <add>, %36, %cst_9 [0] : vector<8x4xf32> to vector<4xf32>
    %38 = vector.shape_cast %37 : vector<4xf32> to vector<1x4xf32>
    %cst_10 = arith.constant 0.000000e+00 : f32
    %39 = vector.broadcast %cst_10 : f32 to vector<1x4xf32>
    %40 = arith.cmpf ogt, %38, %39 : vector<1x4xf32>
    %cst_11 = arith.constant 1.000000e+00 : f32
    %41 = vector.broadcast %cst_11 : f32 to vector<1x4xf32>
    %42 = arith.select %40, %38, %41 : vector<1x4xi1>, vector<1x4xf32>
    %cst_12 = arith.constant 0.000000e+00 : f32
    %43 = vector.broadcast %cst_12 : f32 to vector<1x4xf32>
    %44 = arith.cmpf ogt, %38, %43 : vector<1x4xf32>
    %45 = vector.broadcast %42 : vector<1x4xf32> to vector<8x4xf32>
    %46 = arith.divf %36, %45 : vector<8x4xf32>
    %cst_13 = arith.constant 0.000000e+00 : f32
    %47 = vector.shape_cast %44 : vector<1x4xi1> to vector<1x4xi1>
    %48 = vector.broadcast %47 : vector<1x4xi1> to vector<8x4xi1>
    %49 = vector.broadcast %cst_13 : f32 to vector<8x4xf32>
    %50 = arith.select %48, %46, %49 : vector<8x4xi1>, vector<8x4xf32>
    %c0_14 = arith.constant 0 : index
    %c0_15 = arith.constant 0 : index
    %51 = vector.load %arg2[%c0_14, %c0_15] : memref<8x4xf32, #tpu.memory_space<vmem>>, vector<8x4xf32>
    tpu.vector_store %arg2[%c0_14, %c0_15], %24 {strides = array<i32>} : memref<8x4xf32, #tpu.memory_space<vmem>>, vector<8x4xf32>,
    %c0_16 = arith.constant 0 : index
    %c0_17 = arith.constant 0 : index
    %52 = vector.load %arg3[%c0_16, %c0_17] : memref<8x4xf32, #tpu.memory_space<vmem>>, vector<8x4xf32>
    tpu.vector_store %arg3[%c0_16, %c0_17], %35 {strides = array<i32>} : memref<8x4xf32, #tpu.memory_space<vmem>>, vector<8x4xf32>,
    %53 = tpu.transpose %50, [1, 0] : vector<8x4xf32> -> vector<4x8xf32>
    %c0_18 = arith.constant 0 : index
    %c0_19 = arith.constant 0 : index
    %54 = vector.load %arg4[%c0_18, %c0_19] : memref<4x8xf32, #tpu.memory_space<vmem>>, vector<4x8xf32>
    tpu.vector_store %arg4[%c0_18, %c0_19], %53 {strides = array<i32>} : memref<4x8xf32, #tpu.memory_space<vmem>>, vector<4x8xf32>,
    return
  }
}

</mosaic_0001>

<llo_original>
// kernel: tpu_custom_call.1
$region0: #{tpu_custom_call.1}
  #allocation0 [shape = 'u32[]', space=smem, size = 0x4, offset = 0x4, fixed_abs, tag = 'smem constant byte address 0x4 - core index']
  #allocation1 [shape = 'u32[144,128]{1,0:T(1,128)}', space=vmem, size = 0x12000, scoped, tag = 'internal scratch']
  %s0 = inlined_call_operand.vmem [shape: f32[8,4], index: 0, kind: input, shape index: {}]
  %s1 = inlined_call_operand.vmem [shape: f32[8,4], index: 1, kind: input, shape index: {}]
  %s2 = inlined_call_operand.vmem [shape: f32[8,4], index: 2, kind: output, shape index: {0}]
  %s3 = inlined_call_operand.vmem [shape: f32[8,4], index: 3, kind: output, shape index: {1}]
  %s4 = inlined_call_operand.hbm [shape: f32[4,8], index: 4, kind: output, shape index: {2}]
  %5 = xla_tuple %s2, %s3, %s4
  %s6 = sld [smem:[#allocation0]]
  $region34: #{tpu_custom_call.1} parent=0
    _
  %s8 = ssub.s32 1, %s6
  %s9 = scalar_select 0, %s8, %s6
  $region1: #{tpu_custom_call.1} parent=0
    #allocation2 [shape = 'u8[2048]{0}', space=vmem, size = 0x800, scoped, tag = 'output window, operand 2, single buffered']
    #allocation3 [shape = 's32[1]{0}', space=sflag, size = 0x4, scoped, tag = 'scoped memory for tpu_custom_call.1']
    %10 = vsyncpa [#allocation3], 0
    // Predicated region
    $region2: #{tpu_custom_call.1} parent=1 // pred_check
      _
    $region3: #{tpu_custom_call.1} parent=1 // pred_check_branch
      %12 = sbr.rel (0) target = $region5
    $region4: #{tpu_custom_call.1} parent=1 // pred_region
      _
    $region5: #{tpu_custom_call.1} parent=1 // pred_fallthru
      _
    // Predicated region
    $region6: #{tpu_custom_call.1} parent=1 // pred_check
      _
    $region7: #{tpu_custom_call.1} parent=1 // pred_check_branch
      %14 = sbr.rel (0) target = $region9
    $region8: #{tpu_custom_call.1} parent=1 // pred_region
      _
    $region9: #{tpu_custom_call.1} parent=1 // pred_fallthru
      _
    %v15 = vld [vmem:[%s0] sm:$0xff]
    %v16 = vld [vmem:[%s1] sm:$0xff]
    %vm17 = vcmask 31744
    %v18 = vsel %vm17, %v15, -inf
    %19 = vmax.xlane.f32.xlu0 %v18
    %v20 = vpop.xlane.xlu0 %19
    %v21 = vsub.f32 %v15, %v20
    %v22 = vmul.f32 %v21, 1.442695
    %v23 = vpow.pop %v22
    %v24 = vsel %vm17, %v23, 0.0
    %25 = vadd.xlane.f32.xlu0 %v24
    %v26 = vpop.xlane.xlu0 %25
    %v27 = vrcp.pop %v26
    %v28 = vmul.f32 %v23, %v27
    %v29 = vmul.f32 %v28, 10.0
    %v30 = vadd.f32 %v29, %v16
    %v31 = vsel %vm17, %v30, -inf
    %32 = vmax.xlane.f32.xlu0 %v31
    %v33 = vpop.xlane.xlu0 %32
    %v34 = vsub.f32 %v30, %v33
    %v35 = vmul.f32 %v34, 1.442695
    %v36 = vpow.pop %v35
    %v37 = vsel %vm17, %v36, 0.0
    %38 = vadd.xlane.f32.xlu0 %v37
    %v39 = vpop.xlane.xlu0 %38
    %v40 = vrcp.pop %v39
    %v41 = vmul.f32 %v36, %v40
    %v42 = vlaneseq
    %v43 = vand.u32 %v42, 127
    %vm44 = vcmp.eq.f32.partialorder %v30, %v33
    %v45 = vsel %vm44, %v43, 4
    %v46 = vsel %vm17, %v45, 2147483647
    %v47 = vand.u32 %v46, 65535
    %v48 = vshra.s32 %v46, 16
    %v49 = vcvt.s32.f32 %v47
    %v50 = vcvt.s32.f32 %v48
    %51 = vmin.xlane.f32.xlu0 %v50
    %v52 = vpop.xlane.xlu0 %51
    %vm53 = vcmp.eq.f32.partialorder %v50, %v52
    %v54 = vsel %vm53, %v49, inf
    %55 = vmin.xlane.f32.xlu0 %v54
    %v56 = vpop.xlane.xlu0 %55
    %v57 = vcvt.f32.s32 %v56
    %v58 = vcvt.f32.s32 %v52
    %v59 = vshll.u32 %v58, 16
    %v60 = vadd.s32 %v59, %v57
    %vm61 = vcmp.eq.s32.totalorder %v43, %v60
    %v62 = vsel %vm61, 1, 0
    %v63 = vcvt.s32.f32 %v62
    %v64 = vmul.f32 %v41, %v63
    %v65 = vsel %vm17, %v64, 0.0
    %v66 = vrot.slane %v65, 4
    %v67 = vadd.f32 %v65, %v66
    %v68 = vrot.slane %v67, 2
    %v69 = vadd.f32 %v67, %v68
    %v70 = vrot.slane %v69, 1
    %v71 = vadd.f32 %v69, %v70
    %vm72 = vcmp.gt.f32.partialorder %v71, 0.0
    %v73 = vsel %vm72, %v71, 1.0
    %v74 = vrcp.pop %v73
    %v75 = vmul.f32 %v64, %v74
    %v76 = vsel %vm72, 1, 0
    %vm77 = vcmp.eq.s32.totalorder %v76, 1
    %v78 = vsel %vm77, %v75, 0.0
    %79 = vst.msk [vmem:[%s2] sm:$0xff] %vm17, %v41
    %80 = vst.msk [vmem:[%s3] sm:$0xff] %vm17, %v63
    %81 = vxpose.xlu0.b32.start [1/16] %v78, 128
    %82 = vxpose.xlu0.b32.cont [2/16] 0.0, 128
    %83 = vxpose.xlu0.b32.cont [3/16] 0.0, 128
    %84 = vxpose.xlu0.b32.cont [4/16] 0.0, 128
    %85 = vxpose.xlu0.b32.cont [5/16] 0.0, 128
    %86 = vxpose.xlu0.b32.cont [6/16] 0.0, 128
    %87 = vxpose.xlu0.b32.cont [7/16] 0.0, 128
    %88 = vxpose.xlu0.b32.cont [8/16] 0.0, 128
    %89 = vxpose.xlu0.b32.cont [9/16] 0.0, 128
    %90 = vxpose.xlu0.b32.cont [10/16] 0.0, 128
    %91 = vxpose.xlu0.b32.cont [11/16] 0.0, 128
    %92 = vxpose.xlu0.b32.cont [12/16] 0.0, 128
    %93 = vxpose.xlu0.b32.cont [13/16] 0.0, 128
    %94 = vxpose.xlu0.b32.cont [14/16] 0.0, 128
    %95 = vxpose.xlu0.b32.cont [15/16] 0.0, 128
    %96 = vxpose.xlu0.b32.end [16/16] 0.0, 128
    %v97 = vpop.trf.xlu0
    %v98 = vpop.trf.xlu0
    %v99 = vpop.trf.xlu0
    %v100 = vpop.trf.xlu0
    %v101 = vpop.trf.xlu0
    %v102 = vpop.trf.xlu0
    %v103 = vpop.trf.xlu0
    %v104 = vpop.trf.xlu0
    %v105 = vpop.trf.xlu0
    %v106 = vpop.trf.xlu0
    %v107 = vpop.trf.xlu0
    %v108 = vpop.trf.xlu0
    %v109 = vpop.trf.xlu0
    %v110 = vpop.trf.xlu0
    %v111 = vpop.trf.xlu0
    %v112 = vpop.trf.xlu0
    %vm113 = vcmask 60416
    %114 = vst.msk [vmem:[#allocation2] sm:$0xf] %vm113, %v97
    // Predicated region
    $region10: #{tpu_custom_call.1} parent=1 // pred_check
      _
    $region11: #{tpu_custom_call.1} parent=1 // pred_check_branch
      %116 = sbr.rel (0) target = $region13
    $region12: #{tpu_custom_call.1} parent=1 // pred_region
      _
    $region13: #{tpu_custom_call.1} parent=1 // pred_fallthru
      _
    // Predicated region
    $region14: #{tpu_custom_call.1} parent=1 // pred_check
      _
    $region15: #{tpu_custom_call.1} parent=1 // pred_check_branch
      %118 = sbr.rel (0) target = $region17
    $region16: #{tpu_custom_call.1} parent=1 // pred_region
      _
    $region17: #{tpu_custom_call.1} parent=1 // pred_fallthru
      _
    // Predicated region
    $region18: #{tpu_custom_call.1} parent=1 // pred_check
      _
    $region19: #{tpu_custom_call.1} parent=1 // pred_check_branch
      %120 = sbr.rel (0) target = $region21
    $region20: #{tpu_custom_call.1} parent=1 // pred_region
      %s122 = ssub.s32 64, 64
      %123 = vsyncadd [#allocation3], %s122
      %s125 = sshll.u32 [#allocation2], 4
      %s126 = int_to_ptr.vmem [resolvable:$true] %s125
      %128 = dma.vmem_to_hbm [thread:$0]  %s126, 64, %s4, [#allocation3]
    $region21: #{tpu_custom_call.1} parent=1 // pred_fallthru
      _
    // Predicated region
    $region22: #{tpu_custom_call.1} parent=1 // pred_check
      _
    $region23: #{tpu_custom_call.1} parent=1 // pred_check_branch
      %130 = sbr.rel (0) target = $region25
    $region24: #{tpu_custom_call.1} parent=1 // pred_region
      _
    $region25: #{tpu_custom_call.1} parent=1 // pred_fallthru
      _
    // Predicated region
    $region26: #{tpu_custom_call.1} parent=1 // pred_check
      _
    $region27: #{tpu_custom_call.1} parent=1 // pred_check_branch
      %132 = sbr.rel (0) target = $region29
    $region28: #{tpu_custom_call.1} parent=1 // pred_region
      _
    $region29: #{tpu_custom_call.1} parent=1 // pred_fallthru
      _
    // Predicated region
    $region30: #{tpu_custom_call.1} parent=1 // pred_check
      _
    $region31: #{tpu_custom_call.1} parent=1 // pred_check_branch
      %134 = sbr.rel (0) target = $region33
    $region32: #{tpu_custom_call.1} parent=1 // pred_region
      %135 = dma.done [#allocation3], 64
    $region33: #{tpu_custom_call.1} parent=1 // pred_fallthru
      _
    %136 = vsyncpa [#allocation3], 1

</llo_original>
